<compile_context>
chip_gen: v7x
topology: tpu7x:2x2x1
jax: 0.10.0
libtpu: 0.0.40
codegen_flags: <defaults>
</compile_context>

<pallas_src>
import functools

import jax
import jax.numpy as jnp
from jax import lax
from jax.experimental import pallas as pl
from jax.experimental.pallas import tpu as pltpu


def _round_up(x, m):
    return ((x + m - 1) // m) * m


def _pick_tile_n(n, c, itemsize, vmem_budget_bytes=8 * 1024 * 1024):
    """Pick a batch-tile size that keeps the double-buffered input tile plus a
    few live f32 temporaries under a conservative VMEM budget (v7x-safe)."""
    bytes_per_row = c * (2 * itemsize + 4 * 4)  # 2x DMA buffers + ~4 f32 temps
    t = vmem_budget_bytes // max(bytes_per_row, 1)
    t = max(8, min(512, (t // 8) * 8))          # sublane-aligned, capped
    return int(min(t, _round_up(n, 8)))


def _ls_ce_kernel(logp_ref, tgt_ref, out_ref, *, confidence, smoothing,
                  num_classes, num_rows, tile_n):
    """Per-tile kernel.

    logp_ref : (tile_n, C) VMEM, any float dtype (upcast to f32 here)
    tgt_ref  : (tile_n, 1) VMEM int32
    out_ref  : (tile_n, 1) VMEM f32  -- per-sample loss for this tile
    """
    i = pl.program_id(0)

    logp = logp_ref[...].astype(jnp.float32)               # (tile_n, C)
    tgt = tgt_ref[...]                                      # (tile_n, 1) i32

    # Fused nll/smooth reduction:
    #   conf*nll_i + smoothing*smooth_i
    #     = -sum_c( (conf * 1[c == t_i] + smoothing/C) * logp[i, c] )
    col = lax.broadcasted_iota(jnp.int32, logp.shape, 1)    # (tile_n, C)
    onehot = (col == tgt).astype(jnp.float32)               # (tile_n, C)
    w = confidence * onehot + (smoothing / num_classes)
    per_sample = -jnp.sum(w * logp, axis=-1, keepdims=True)  # (tile_n, 1)

    # Mask rows past the true batch size (padded last tile may hold garbage).
    row = i * tile_n + lax.broadcasted_iota(jnp.int32, (tile_n, 1), 0)
    per_sample = jnp.where(row < num_rows, per_sample, 0.0)

    out_ref[...] = per_sample


def label_smoothing_cross_entropy(logprobs, target, *, smoothing=0.1,
                                  tile_n=None):
    """logprobs: (N, C) float (f32 or bf16), target: (N,) int -> scalar f32."""
    assert smoothing < 1.0
    n, c = logprobs.shape
    itemsize = logprobs.dtype.itemsize
    if tile_n is None:
        tile_n = _pick_tile_n(n, c, itemsize)
    tile_n = int(min(_round_up(max(int(tile_n), 1), 8), _round_up(n, 8)))
    num_blocks = pl.cdiv(n, tile_n)

    tgt2d = target.reshape(n, 1).astype(jnp.int32)

    kernel = functools.partial(
        _ls_ce_kernel,
        confidence=float(1.0 - smoothing),
        smoothing=float(smoothing),
        num_classes=c,
        num_rows=n,
        tile_n=tile_n,
    )

    per_sample = pl.pallas_call(
        kernel,
        out_shape=jax.ShapeDtypeStruct((n, 1), jnp.float32),
        grid=(num_blocks,),
        in_specs=[
            pl.BlockSpec((tile_n, c), lambda i: (i, 0)),   # logprobs tile
            pl.BlockSpec((tile_n, 1), lambda i: (i, 0)),   # target tile
        ],
        out_specs=pl.BlockSpec((tile_n, 1), lambda i: (i, 0)),
        compiler_params=pltpu.CompilerParams(
            dimension_semantics=("parallel",)),
        cost_estimate=pl.CostEstimate(
            flops=6 * n * c,
            transcendentals=0,
            bytes_accessed=n * c * itemsize + n * 4 + n * 4),
    )(logprobs, tgt2d)

    # Tiny final reduction in plain JAX keeps the grid axis fully parallel
    # (both v7x TensorCores share the N-tiles; neutral on v5e/v6e).
    return jnp.mean(per_sample)


def _reference(logprobs, target, *, smoothing=0.1):
    """Pure-JAX mirror of the PyTorch forward."""
    lp = logprobs.astype(jnp.float32)
    nll = -jnp.take_along_axis(lp, target[:, None].astype(jnp.int32),
                               axis=-1)[:, 0]
    smooth = -jnp.mean(lp, axis=-1)
    conf = 1.0 - smoothing
    return jnp.mean(conf * nll + smoothing * smooth)


if __name__ == "__main__":
    key = jax.random.PRNGKey(0)
    k1, k2, k3, k4 = jax.random.split(key, 4)

    # Case 1: small, tile-aligned shapes.
    N, C = 8, 128
    logits = jax.random.normal(k1, (N, C), dtype=jnp.float32)
    logprobs = jax.nn.log_softmax(logits, axis=-1)
    target = jax.random.randint(k2, (N,), 0, C, dtype=jnp.int32)

    loss = jax.block_until_ready(
        label_smoothing_cross_entropy(logprobs, target, smoothing=0.1))
    ref = _reference(logprobs, target, smoothing=0.1)
    assert jnp.allclose(loss, ref, rtol=1e-5, atol=1e-5), (loss, ref)

    # Case 2: multi-block grid with N not a multiple of the tile
    # (exercises pipelining across blocks and padded-row masking).
    N2, C2 = 50, 256
    logits2 = jax.random.normal(k3, (N2, C2), dtype=jnp.float32)
    logprobs2 = jax.nn.log_softmax(logits2, axis=-1)
    target2 = jax.random.randint(k4, (N2,), 0, C2, dtype=jnp.int32)

    loss2 = jax.block_until_ready(
        label_smoothing_cross_entropy(logprobs2, target2, smoothing=0.1,
                                      tile_n=16))
    ref2 = _reference(logprobs2, target2, smoothing=0.1)
    assert jnp.allclose(loss2, ref2, rtol=1e-5, atol=1e-5), (loss2, ref2)

    print("KERNEL_OK")
</pallas_src>

<mosaic_0001>
module attributes {stable_mosaic.version = 11 : i64} {
  func.func @_ls_ce_kernel(%arg0: i32, %arg1: memref<8x128xf32, #tpu.memory_space<vmem>>, %arg2: memref<8x1xi32, #tpu.memory_space<vmem>>, %arg3: memref<8x1xf32, #tpu.memory_space<vmem>>) attributes {dimension_semantics = [#tpu.dimension_semantics<parallel>], iteration_bounds = array<i64: 1>, scalar_prefetch = 0 : i64, scratch_operands = 0 : i64, tpu.core_type = #tpu.core_type<tc>, window_params = [{transform_indices = @transform_0, window_bounds = array<i64: 8, 128>}, {transform_indices = @transform_1, window_bounds = array<i64: 8, 1>}, {transform_indices = @transform_2, window_bounds = array<i64: 8, 1>}]} {
    %c0 = arith.constant 0 : index
    %c0_0 = arith.constant 0 : index
    %0 = vector.load %arg1[%c0, %c0_0] : memref<8x128xf32, #tpu.memory_space<vmem>>, vector<8x128xf32>
    %c0_1 = arith.constant 0 : index
    %c0_2 = arith.constant 0 : index
    %1 = vector.load %arg2[%c0_1, %c0_2] : memref<8x1xi32, #tpu.memory_space<vmem>>, vector<8x1xi32>
    %2 = tpu.iota {dimensions = array<i32: 1>} : vector<8x128xi32>
    %3 = vector.broadcast %1 : vector<8x1xi32> to vector<8x128xi32>
    %4 = arith.cmpi eq, %2, %3 : vector<8x128xi32>
    %5 = arith.extui %4 : vector<8x128xi1> to vector<8x128xi32>
    %6 = arith.sitofp %5 : vector<8x128xi32> to vector<8x128xf32>
    %cst = arith.constant 0.899999976 : f32
    %7 = vector.broadcast %cst : f32 to vector<8x128xf32>
    %8 = arith.mulf %7, %6 : vector<8x128xf32>
    %cst_3 = arith.constant 7.812500e-04 : f32
    %9 = vector.broadcast %cst_3 : f32 to vector<8x128xf32>
    %10 = arith.addf %8, %9 : vector<8x128xf32>
    %11 = arith.mulf %10, %0 : vector<8x128xf32>
    %cst_4 = arith.constant dense<0.000000e+00> : vector<8xf32>
    %12 = vector.multi_reduction <add>, %11, %cst_4 [1] : vector<8x128xf32> to vector<8xf32>
    %13 = vector.shape_cast %12 : vector<8xf32> to vector<8x1xf32>
    %cst_5 = arith.constant 0.000000e+00 : f32
    %14 = vector.broadcast %cst_5 : f32 to vector<8x1xf32>
    %15 = arith.subf %14, %13 : vector<8x1xf32>
    %c8_i32 = arith.constant 8 : i32
    %16 = arith.muli %arg0, %c8_i32 : i32
    %17 = tpu.iota {dimensions = array<i32: 0>} : vector<8x1xi32>
    %18 = vector.broadcast %16 : i32 to vector<8x1xi32>
    %19 = arith.addi %18, %17 : vector<8x1xi32>
    %c8_i32_6 = arith.constant 8 : i32
    %20 = vector.broadcast %c8_i32_6 : i32 to vector<8x1xi32>
    %21 = arith.cmpi slt, %19, %20 : vector<8x1xi32>
    %cst_7 = arith.constant 0.000000e+00 : f32
    %22 = vector.broadcast %cst_7 : f32 to vector<8x1xf32>
    %23 = arith.select %21, %15, %22 : vector<8x1xi1>, vector<8x1xf32>
    %c0_8 = arith.constant 0 : index
    %c0_9 = arith.constant 0 : index
    %24 = vector.load %arg3[%c0_8, %c0_9] : memref<8x1xf32, #tpu.memory_space<vmem>>, vector<8x1xf32>
    tpu.vector_store %arg3[%c0_8, %c0_9], %23 {strides = array<i32>} : memref<8x1xf32, #tpu.memory_space<vmem>>, vector<8x1xf32>,
    return
  }
  func.func @transform_0(%arg0: i32) -> (i32, i32) {
    %c0_i32 = arith.constant 0 : i32
    %c0_i32_0 = arith.constant 0 : i32
    return %arg0, %c0_i32 : i32, i32
  }
  func.func @transform_1(%arg0: i32) -> (i32, i32) {
    %c0_i32 = arith.constant 0 : i32
    %c0_i32_0 = arith.constant 0 : i32
    return %arg0, %c0_i32 : i32, i32
  }
  func.func @transform_2(%arg0: i32) -> (i32, i32) {
    %c0_i32 = arith.constant 0 : i32
    %c0_i32_0 = arith.constant 0 : i32
    return %arg0, %c0_i32 : i32, i32
  }
}

</mosaic_0001>

<llo_original>
// kernel: tpu_custom_call.1
$region0: #{tpu_custom_call.1}
  #allocation0 [shape = 'u32[]', space=smem, size = 0x4, offset = 0x4, fixed_abs, tag = 'smem constant byte address 0x4 - core index']
  #allocation1 [shape = 'u32[144,128]{1,0:T(1,128)}', space=vmem, size = 0x12000, scoped, tag = 'internal scratch']
  %s0 = inlined_call_operand.vmem [shape: f32[8,128], index: 0, kind: input, shape index: {}]
  %s1 = inlined_call_operand.vmem [shape: s32[8,1], index: 1, kind: input, shape index: {}]
  %s2 = inlined_call_operand.vmem [shape: f32[8,1], index: 2, kind: output, shape index: {}]
  %s3 = sld [smem:[#allocation0]]
  $region18: #{tpu_custom_call.1} parent=0
    _
  %s5 = ssub.s32 1, %s3
  %s6 = scalar_select 0, %s5, %s3
  // Predicated region
  $region2: #{tpu_custom_call.1} parent=0 // pred_check
    _
  $region3: #{tpu_custom_call.1} parent=0 // pred_check_branch
    %8 = sbr.rel (0) target = $region5
  $region4: #{tpu_custom_call.1} parent=0 // pred_region
    _
  $region5: #{tpu_custom_call.1} parent=0 // pred_fallthru
    _
  // Predicated region
  $region6: #{tpu_custom_call.1} parent=0 // pred_check
    _
  $region7: #{tpu_custom_call.1} parent=0 // pred_check_branch
    %10 = sbr.rel (0) target = $region9
  $region8: #{tpu_custom_call.1} parent=0 // pred_region
    _
  $region9: #{tpu_custom_call.1} parent=0 // pred_fallthru
    _
  %v11 = vld [vmem:[%s0] sm:$0xff]
  %v12 = vld [vmem:[%s1] sm:$0xff]
  %v13 = vlaneseq
  %v14 = vand.u32 %v13, 127
  %15 = vset.pattern.permute.xlu0 0
  %16 = vperm.xlu0 %15, %v12
  %v17 = vpop.permute.xlu0 %16
  %vm18 = vcmp.eq.s32.totalorder %v14, %v17
  %v19 = vsel %vm18, 1, 0
  %v20 = vcvt.s32.f32 %v19
  %v21 = vmul.f32 %v20, 0.9
  %v22 = vadd.f32 %v21, 0.00078125
  %v23 = vmul.f32 %v22, %v11
  %24 = vadd.xlane.f32.xlu0 %v23
  %v25 = vpop.xlane.xlu0 %24
  %v26 = vsub.f32 0.0, %v25
  %s27 = smul.u32 0, 8
  %v28 = vlaneseq
  %v29 = vshrl.u32 %v28, 7
  %v30 = vstv %s27
  %v31 = vadd.s32 %v30, %v29
  %vm32 = vcmp.lt.s32.totalorder %v31, 8
  %v33 = vsel %vm32, %v26, 0.0
  %vm34 = vcmask 7168
  %35 = vst.msk [vmem:[%s2] sm:$0xff] %vm34, %v33
  // Predicated region
  $region10: #{tpu_custom_call.1} parent=0 // pred_check
    _
  $region11: #{tpu_custom_call.1} parent=0 // pred_check_branch
    %37 = sbr.rel (0) target = $region13
  $region12: #{tpu_custom_call.1} parent=0 // pred_region
    _
  $region13: #{tpu_custom_call.1} parent=0 // pred_fallthru
    _
  // Predicated region
  $region14: #{tpu_custom_call.1} parent=0 // pred_check
    _
  $region15: #{tpu_custom_call.1} parent=0 // pred_check_branch
    %39 = sbr.rel (0) target = $region17
  $region16: #{tpu_custom_call.1} parent=0 // pred_region
    _
  $region17: #{tpu_custom_call.1} parent=0 // pred_fallthru
    _

</llo_original>
